<compile_context>
chip_gen: v5e
topology: v5e:2x2
jax: 0.10.0
libtpu: 0.0.40
codegen_flags: <defaults>
</compile_context>

<pallas_src>
import functools

import jax
import jax.numpy as jnp
from jax.experimental import pallas as pl
from jax.experimental.pallas import tpu as pltpu


def _lstm_head_kernel(x_ref, gate_w_ref, head_w_ref, out_ref, xw_ref, *,
                      batch, seq_len, input_size, hidden_size):
    """x_ref:      (S*B, I)      time-major rows (row t*B + b == timestep t, batch b)
    gate_w_ref: (I+H+1, 4H)   [W_ih ; W_hh ; b], i/f/o columns pre-scaled by 0.5
    head_w_ref: (H+1, out_pad) [W_out ; b_out], lane-padded
    out_ref:    (B, out_pad)  lane-padded Linear-head result
    xw_ref:     (S*B, 4H)     scratch for the hoisted input projection
    """
    B, S, I, H = batch, seq_len, input_size, hidden_size

    # ---- Hoisted input projection for ALL timesteps: one MXU matmul, bias folded in.
    xw_ref[...] = (jnp.dot(x_ref[...], gate_w_ref[0:I, :],
                           preferred_element_type=jnp.float32)
                   + gate_w_ref[I + H:I + H + 1, :])

    # ---- Load the recurrent weight ONCE (refs are stateful; avoid per-step reload).
    w_hh = gate_w_ref[I:I + H, :]

    # ---- Lane mask for the single-tanh gate trick, hoisted out of the loop
    #      (JAX does not CSE broadcast_in_dim).
    lane = jax.lax.broadcasted_iota(jnp.int32, (B, 4 * H), dimension=1)
    is_g_lane = (lane >= 2 * H) & (lane < 3 * H)

    h = jnp.zeros((B, H), jnp.float32)
    c = jnp.zeros((B, H), jnp.float32)

    # ---- Strictly serial recurrence, fully unrolled for small static S.
    # TODO(synk): switch to lax.fori_loop with (h, c) carry for larger S.
    for t in range(S):
        # Contiguous, static time-major slice + one fused (B,H)@(H,4H) MXU matmul.
        z = (xw_ref[t * B:(t + 1) * B, :]
             + jnp.dot(h, w_hh, preferred_element_type=jnp.float32))
        # ONE full-width EUP pass: i/f/o pre-activations were scaled by 0.5 in the
        # wrapper, so sigmoid(x) = 0.5 * tanh(x/2) + 0.5 on those lanes; g lanes
        # keep plain tanh.  PyTorch gate order along the fused dim: i, f, g, o.
        t_all = jnp.tanh(z)
        gates = jnp.where(is_g_lane, t_all, 0.5 * t_all + 0.5)
        i_g = gates[:, 0 * H:1 * H]
        f_g = gates[:, 1 * H:2 * H]
        g_g = gates[:, 2 * H:3 * H]
        o_g = gates[:, 3 * H:4 * H]
        c = f_g * c + i_g * g_g
        h = o_g * jnp.tanh(c)

    # ---- Lane-dense (zero-padded) Linear head on the last hidden state.
    out_ref[...] = (jnp.dot(h, head_w_ref[0:H, :],
                            preferred_element_type=jnp.float32)
                    + head_w_ref[H:H + 1, :])


def init_params(key, input_size, label_size, neural_size, pred_steps):
    """Deterministic synthetic parameters matching nn.LSTM / nn.Linear shapes,
    transposed and gate-fused so math is x @ W (gate order i,f,g,o)."""
    H = neural_size
    out_f = label_size * pred_steps
    ks = jax.random.split(key, 6)
    bound = 1.0 / float(H) ** 0.5
    # nn.LSTM: weight_ih_l0 (4H, I), weight_hh_l0 (4H, H), bias_ih/bias_hh (4H,)
    # stored here transposed + fused: (I, 4H), (H, 4H), combined bias (1, 4H).
    w_ih = jax.random.uniform(ks[0], (input_size, 4 * H), jnp.float32, -bound, bound)
    w_hh = jax.random.uniform(ks[1], (H, 4 * H), jnp.float32, -bound, bound)
    b_ih = jax.random.uniform(ks[2], (1, 4 * H), jnp.float32, -bound, bound)
    b_hh = jax.random.uniform(ks[3], (1, 4 * H), jnp.float32, -bound, bound)
    b = b_ih + b_hh
    # nn.Linear(H, out_f): weight (out_f, H), bias (out_f,) -> stored (H, out_f), (1, out_f)
    w_out = jax.random.uniform(ks[4], (H, out_f), jnp.float32, -bound, bound)
    b_out = jax.random.uniform(ks[5], (1, out_f), jnp.float32, -bound, bound)
    return w_ih, w_hh, b, w_out, b_out


def direct_lstm_forward(x, params, *, neural_size, pred_steps, label_size):
    """x: (B, S, I) batch-first, like the PyTorch module.  Returns (B, pred_steps, label_size)."""
    B, S, I = x.shape
    H = neural_size
    out_f = pred_steps * label_size
    w_ih, w_hh, b, w_out, b_out = params

    # Fold sigmoid's /2 into the i/f/o gate columns (exact power-of-two scale)
    # so the kernel needs a single full-width tanh per step; g columns unscaled.
    scale = jnp.full((1, 4 * H), 0.5, jnp.float32).at[:, 2 * H:3 * H].set(1.0)
    gate_slab = jnp.concatenate([w_ih * scale, w_hh * scale, b * scale], axis=0)

    # Lane-dense output head: zero-pad out_features up to a multiple of 128 lanes,
    # and stack weight + bias into one slab (weight rows 0:H, bias row H).
    out_pad = ((out_f + 127) // 128) * 128
    head_slab = jnp.zeros((H + 1, out_pad), jnp.float32)
    head_slab = head_slab.at[:H, :out_f].set(w_out)
    head_slab = head_slab.at[H:, :out_f].set(b_out)

    # Time-major flatten: row t*B + b, so the per-step kernel read is contiguous.
    x2d = jnp.transpose(x, (1, 0, 2)).reshape(S * B, I)

    out = pl.pallas_call(
        functools.partial(_lstm_head_kernel, batch=B, seq_len=S,
                          input_size=I, hidden_size=H),
        out_shape=jax.ShapeDtypeStruct((B, out_pad), jnp.float32),
        in_specs=[pl.BlockSpec(memory_space=pltpu.MemorySpace.VMEM)] * 3,
        out_specs=pl.BlockSpec(memory_space=pltpu.MemorySpace.VMEM),
        scratch_shapes=[pltpu.VMEM((S * B, 4 * H), jnp.float32)],  # precomputed XW
        compiler_params=pltpu.CompilerParams(vmem_limit_bytes=32 * 1024 * 1024),
    )(x2d, gate_slab, head_slab)

    return out[:, :out_f].reshape(B, pred_steps, label_size)


def reference_forward(x, params, *, neural_size, pred_steps, label_size):
    """Pure-JAX reference mirroring PyTorch nn.LSTM + nn.Linear semantics."""
    w_ih, w_hh, b, w_out, b_out = params
    B, S, I = x.shape
    H = neural_size
    h = jnp.zeros((B, H), jnp.float32)
    c = jnp.zeros((B, H), jnp.float32)
    for t in range(S):
        z = x[:, t, :] @ w_ih + h @ w_hh + b        # (B, 4H), gate order i,f,g,o
        i_g = jax.nn.sigmoid(z[:, 0 * H:1 * H])
        f_g = jax.nn.sigmoid(z[:, 1 * H:2 * H])
        g_g = jnp.tanh(z[:, 2 * H:3 * H])
        o_g = jax.nn.sigmoid(z[:, 3 * H:4 * H])
        c = f_g * c + i_g * g_g
        h = o_g * jnp.tanh(c)
    o2 = h @ w_out + b_out
    return o2.reshape(B, pred_steps, label_size)


if __name__ == "__main__":
    # Small shapes consistent with the module's forward: x is (batch, seq, input_size)
    batch, seq, input_size = 2, 8, 16
    neural_size = 32          # LSTM hidden size -> fused gate dim 4H = 128 (lane-dense)
    label_size = 4
    pred_steps = 3            # Linear out_features = label_size * pred_steps = 12

    key = jax.random.PRNGKey(0)
    k_x, k_p = jax.random.split(key)
    x = jax.random.normal(k_x, (batch, seq, input_size), jnp.float32)
    params = init_params(k_p, input_size, label_size, neural_size, pred_steps)

    out = direct_lstm_forward(x, params, neural_size=neural_size,
                              pred_steps=pred_steps, label_size=label_size)
    out = jax.block_until_ready(out)

    ref = reference_forward(x, params, neural_size=neural_size,
                            pred_steps=pred_steps, label_size=label_size)
    assert out.shape == (batch, pred_steps, label_size), out.shape
    # Slightly looser tolerance: sigmoid is computed as 0.5*tanh(x/2)+0.5 in-kernel.
    assert jnp.allclose(out, ref, atol=2e-5, rtol=2e-5), float(jnp.max(jnp.abs(out - ref)))

    print("KERNEL_OK")
</pallas_src>

<mosaic_0001>
module attributes {stable_mosaic.version = 11 : i64} {
  func.func @_lstm_head_kernel(%arg0: memref<16x16xf32, #tpu.memory_space<vmem>>, %arg1: memref<49x128xf32, #tpu.memory_space<vmem>>, %arg2: memref<33x128xf32, #tpu.memory_space<vmem>>, %arg3: memref<2x128xf32, #tpu.memory_space<vmem>>, %arg4: memref<16x128xf32, #tpu.memory_space<vmem>>) attributes {dimension_semantics = [], scalar_prefetch = 0 : i64, scratch_operands = 1 : i64, tpu.core_type = #tpu.core_type<tc>} {
    %c0 = arith.constant 0 : index
    %c0_0 = arith.constant 0 : index
    %0 = vector.load %arg0[%c0, %c0_0] : memref<16x16xf32, #tpu.memory_space<vmem>>, vector<16x16xf32>
    %c0_1 = arith.constant 0 : index
    %c0_2 = arith.constant 0 : index
    %1 = vector.load %arg1[%c0_1, %c0_2] : memref<49x128xf32, #tpu.memory_space<vmem>>, vector<16x128xf32>
    %cst = arith.constant dense<0.000000e+00> : vector<16x128xf32>
    %2 = tpu.matmul %0, %1, %cst {dimension_numbers = #tpu.dot_dimension_numbers<[1], [0], [0], [1], [0, 0, 1, 1], [], []>} : vector<16x16xf32>, vector<16x128xf32>, vector<16x128xf32> -> vector<16x128xf32>
    %c48 = arith.constant 48 : index
    %c0_3 = arith.constant 0 : index
    %3 = vector.load %arg1[%c48, %c0_3] : memref<49x128xf32, #tpu.memory_space<vmem>>, vector<1x128xf32>
    %4 = vector.broadcast %3 : vector<1x128xf32> to vector<16x128xf32>
    %5 = arith.addf %2, %4 : vector<16x128xf32>
    %c0_4 = arith.constant 0 : index
    %c0_5 = arith.constant 0 : index
    %6 = vector.load %arg4[%c0_4, %c0_5] : memref<16x128xf32, #tpu.memory_space<vmem>>, vector<16x128xf32>
    tpu.vector_store %arg4[%c0_4, %c0_5], %5 {strides = array<i32>} : memref<16x128xf32, #tpu.memory_space<vmem>>, vector<16x128xf32>,
    %c16 = arith.constant 16 : index
    %c0_6 = arith.constant 0 : index
    %7 = vector.load %arg1[%c16, %c0_6] : memref<49x128xf32, #tpu.memory_space<vmem>>, vector<32x128xf32>
    %8 = tpu.iota {dimensions = array<i32: 1>} : vector<2x128xi32>
    %c64_i32 = arith.constant 64 : i32
    %9 = vector.broadcast %c64_i32 : i32 to vector<2x128xi32>
    %10 = arith.cmpi sge, %8, %9 : vector<2x128xi32>
    %c96_i32 = arith.constant 96 : i32
    %11 = vector.broadcast %c96_i32 : i32 to vector<2x128xi32>
    %12 = arith.cmpi slt, %8, %11 : vector<2x128xi32>
    %13 = arith.andi %10, %12 : vector<2x128xi1>
    %cst_7 = arith.constant 0.000000e+00 : f32
    %14 = vector.broadcast %cst_7 : f32 to vector<2x32xf32>
    %cst_8 = arith.constant 0.000000e+00 : f32
    %15 = vector.broadcast %cst_8 : f32 to vector<2x32xf32>
    %c0_9 = arith.constant 0 : index
    %c0_10 = arith.constant 0 : index
    %16 = vector.load %arg4[%c0_9, %c0_10] : memref<16x128xf32, #tpu.memory_space<vmem>>, vector<2x128xf32>
    %cst_11 = arith.constant dense<0.000000e+00> : vector<2x128xf32>
    %17 = tpu.matmul %14, %7, %cst_11 {dimension_numbers = #tpu.dot_dimension_numbers<[1], [0], [0], [1], [0, 0, 1, 1], [], []>} : vector<2x32xf32>, vector<32x128xf32>, vector<2x128xf32> -> vector<2x128xf32>
    %18 = arith.addf %16, %17 : vector<2x128xf32>
    %19 = math.tanh %18 : vector<2x128xf32>
    %cst_12 = arith.constant 5.000000e-01 : f32
    %20 = vector.broadcast %cst_12 : f32 to vector<2x128xf32>
    %21 = arith.mulf %20, %19 : vector<2x128xf32>
    %cst_13 = arith.constant 5.000000e-01 : f32
    %22 = vector.broadcast %cst_13 : f32 to vector<2x128xf32>
    %23 = arith.addf %21, %22 : vector<2x128xf32>
    %24 = arith.select %13, %19, %23 : vector<2x128xi1>, vector<2x128xf32>
    %25 = vector.extract_strided_slice %24 {offsets = [0, 0], sizes = [2, 32], strides = [1, 1]} : vector<2x128xf32> to vector<2x32xf32>
    %26 = vector.extract_strided_slice %24 {offsets = [0, 32], sizes = [2, 32], strides = [1, 1]} : vector<2x128xf32> to vector<2x32xf32>
    %27 = vector.extract_strided_slice %24 {offsets = [0, 64], sizes = [2, 32], strides = [1, 1]} : vector<2x128xf32> to vector<2x32xf32>
    %28 = vector.extract_strided_slice %24 {offsets = [0, 96], sizes = [2, 32], strides = [1, 1]} : vector<2x128xf32> to vector<2x32xf32>
    %29 = arith.mulf %26, %15 : vector<2x32xf32>
    %30 = arith.mulf %25, %27 : vector<2x32xf32>
    %31 = arith.addf %29, %30 : vector<2x32xf32>
    %32 = math.tanh %31 : vector<2x32xf32>
    %33 = arith.mulf %28, %32 : vector<2x32xf32>
    %c2 = arith.constant 2 : index
    %c0_14 = arith.constant 0 : index
    %34 = vector.load %arg4[%c2, %c0_14] : memref<16x128xf32, #tpu.memory_space<vmem>>, vector<2x128xf32>
    %cst_15 = arith.constant dense<0.000000e+00> : vector<2x128xf32>
    %35 = tpu.matmul %33, %7, %cst_15 {dimension_numbers = #tpu.dot_dimension_numbers<[1], [0], [0], [1], [0, 0, 1, 1], [], []>} : vector<2x32xf32>, vector<32x128xf32>, vector<2x128xf32> -> vector<2x128xf32>
    %36 = arith.addf %34, %35 : vector<2x128xf32>
    %37 = math.tanh %36 : vector<2x128xf32>
    %cst_16 = arith.constant 5.000000e-01 : f32
    %38 = vector.broadcast %cst_16 : f32 to vector<2x128xf32>
    %39 = arith.mulf %38, %37 : vector<2x128xf32>
    %cst_17 = arith.constant 5.000000e-01 : f32
    %40 = vector.broadcast %cst_17 : f32 to vector<2x128xf32>
    %41 = arith.addf %39, %40 : vector<2x128xf32>
    %42 = arith.select %13, %37, %41 : vector<2x128xi1>, vector<2x128xf32>
    %43 = vector.extract_strided_slice %42 {offsets = [0, 0], sizes = [2, 32], strides = [1, 1]} : vector<2x128xf32> to vector<2x32xf32>
    %44 = vector.extract_strided_slice %42 {offsets = [0, 32], sizes = [2, 32], strides = [1, 1]} : vector<2x128xf32> to vector<2x32xf32>
    %45 = vector.extract_strided_slice %42 {offsets = [0, 64], sizes = [2, 32], strides = [1, 1]} : vector<2x128xf32> to vector<2x32xf32>
    %46 = vector.extract_strided_slice %42 {offsets = [0, 96], sizes = [2, 32], strides = [1, 1]} : vector<2x128xf32> to vector<2x32xf32>
    %47 = arith.mulf %44, %31 : vector<2x32xf32>
    %48 = arith.mulf %43, %45 : vector<2x32xf32>
    %49 = arith.addf %47, %48 : vector<2x32xf32>
    %50 = math.tanh %49 : vector<2x32xf32>
    %51 = arith.mulf %46, %50 : vector<2x32xf32>
    %c4 = arith.constant 4 : index
    %c0_18 = arith.constant 0 : index
    %52 = vector.load %arg4[%c4, %c0_18] : memref<16x128xf32, #tpu.memory_space<vmem>>, vector<2x128xf32>
    %cst_19 = arith.constant dense<0.000000e+00> : vector<2x128xf32>
    %53 = tpu.matmul %51, %7, %cst_19 {dimension_numbers = #tpu.dot_dimension_numbers<[1], [0], [0], [1], [0, 0, 1, 1], [], []>} : vector<2x32xf32>, vector<32x128xf32>, vector<2x128xf32> -> vector<2x128xf32>
    %54 = arith.addf %52, %53 : vector<2x128xf32>
    %55 = math.tanh %54 : vector<2x128xf32>
    %cst_20 = arith.constant 5.000000e-01 : f32
    %56 = vector.broadcast %cst_20 : f32 to vector<2x128xf32>
    %57 = arith.mulf %56, %55 : vector<2x128xf32>
    %cst_21 = arith.constant 5.000000e-01 : f32
    %58 = vector.broadcast %cst_21 : f32 to vector<2x128xf32>
    %59 = arith.addf %57, %58 : vector<2x128xf32>
    %60 = arith.select %13, %55, %59 : vector<2x128xi1>, vector<2x128xf32>
    %61 = vector.extract_strided_slice %60 {offsets = [0, 0], sizes = [2, 32], strides = [1, 1]} : vector<2x128xf32> to vector<2x32xf32>
    %62 = vector.extract_strided_slice %60 {offsets = [0, 32], sizes = [2, 32], strides = [1, 1]} : vector<2x128xf32> to vector<2x32xf32>
    %63 = vector.extract_strided_slice %60 {offsets = [0, 64], sizes = [2, 32], strides = [1, 1]} : vector<2x128xf32> to vector<2x32xf32>
    %64 = vector.extract_strided_slice %60 {offsets = [0, 96], sizes = [2, 32], strides = [1, 1]} : vector<2x128xf32> to vector<2x32xf32>
    %65 = arith.mulf %62, %49 : vector<2x32xf32>
    %66 = arith.mulf %61, %63 : vector<2x32xf32>
    %67 = arith.addf %65, %66 : vector<2x32xf32>
    %68 = math.tanh %67 : vector<2x32xf32>
    %69 = arith.mulf %64, %68 : vector<2x32xf32>
    %c6 = arith.constant 6 : index
    %c0_22 = arith.constant 0 : index
    %70 = vector.load %arg4[%c6, %c0_22] : memref<16x128xf32, #tpu.memory_space<vmem>>, vector<2x128xf32>
    %cst_23 = arith.constant dense<0.000000e+00> : vector<2x128xf32>
    %71 = tpu.matmul %69, %7, %cst_23 {dimension_numbers = #tpu.dot_dimension_numbers<[1], [0], [0], [1], [0, 0, 1, 1], [], []>} : vector<2x32xf32>, vector<32x128xf32>, vector<2x128xf32> -> vector<2x128xf32>
    %72 = arith.addf %70, %71 : vector<2x128xf32>
    %73 = math.tanh %72 : vector<2x128xf32>
    %cst_24 = arith.constant 5.000000e-01 : f32
    %74 = vector.broadcast %cst_24 : f32 to vector<2x128xf32>
    %75 = arith.mulf %74, %73 : vector<2x128xf32>
    %cst_25 = arith.constant 5.000000e-01 : f32
    %76 = vector.broadcast %cst_25 : f32 to vector<2x128xf32>
    %77 = arith.addf %75, %76 : vector<2x128xf32>
    %78 = arith.select %13, %73, %77 : vector<2x128xi1>, vector<2x128xf32>
    %79 = vector.extract_strided_slice %78 {offsets = [0, 0], sizes = [2, 32], strides = [1, 1]} : vector<2x128xf32> to vector<2x32xf32>
    %80 = vector.extract_strided_slice %78 {offsets = [0, 32], sizes = [2, 32], strides = [1, 1]} : vector<2x128xf32> to vector<2x32xf32>
    %81 = vector.extract_strided_slice %78 {offsets = [0, 64], sizes = [2, 32], strides = [1, 1]} : vector<2x128xf32> to vector<2x32xf32>
    %82 = vector.extract_strided_slice %78 {offsets = [0, 96], sizes = [2, 32], strides = [1, 1]} : vector<2x128xf32> to vector<2x32xf32>
    %83 = arith.mulf %80, %67 : vector<2x32xf32>
    %84 = arith.mulf %79, %81 : vector<2x32xf32>
    %85 = arith.addf %83, %84 : vector<2x32xf32>
    %86 = math.tanh %85 : vector<2x32xf32>
    %87 = arith.mulf %82, %86 : vector<2x32xf32>
    %c8 = arith.constant 8 : index
    %c0_26 = arith.constant 0 : index
    %88 = vector.load %arg4[%c8, %c0_26] : memref<16x128xf32, #tpu.memory_space<vmem>>, vector<2x128xf32>
    %cst_27 = arith.constant dense<0.000000e+00> : vector<2x128xf32>
    %89 = tpu.matmul %87, %7, %cst_27 {dimension_numbers = #tpu.dot_dimension_numbers<[1], [0], [0], [1], [0, 0, 1, 1], [], []>} : vector<2x32xf32>, vector<32x128xf32>, vector<2x128xf32> -> vector<2x128xf32>
    %90 = arith.addf %88, %89 : vector<2x128xf32>
    %91 = math.tanh %90 : vector<2x128xf32>
    %cst_28 = arith.constant 5.000000e-01 : f32
    %92 = vector.broadcast %cst_28 : f32 to vector<2x128xf32>
    %93 = arith.mulf %92, %91 : vector<2x128xf32>
    %cst_29 = arith.constant 5.000000e-01 : f32
    %94 = vector.broadcast %cst_29 : f32 to vector<2x128xf32>
    %95 = arith.addf %93, %94 : vector<2x128xf32>
    %96 = arith.select %13, %91, %95 : vector<2x128xi1>, vector<2x128xf32>
    %97 = vector.extract_strided_slice %96 {offsets = [0, 0], sizes = [2, 32], strides = [1, 1]} : vector<2x128xf32> to vector<2x32xf32>
    %98 = vector.extract_strided_slice %96 {offsets = [0, 32], sizes = [2, 32], strides = [1, 1]} : vector<2x128xf32> to vector<2x32xf32>
    %99 = vector.extract_strided_slice %96 {offsets = [0, 64], sizes = [2, 32], strides = [1, 1]} : vector<2x128xf32> to vector<2x32xf32>
    %100 = vector.extract_strided_slice %96 {offsets = [0, 96], sizes = [2, 32], strides = [1, 1]} : vector<2x128xf32> to vector<2x32xf32>
    %101 = arith.mulf %98, %85 : vector<2x32xf32>
    %102 = arith.mulf %97, %99 : vector<2x32xf32>
    %103 = arith.addf %101, %102 : vector<2x32xf32>
    %104 = math.tanh %103 : vector<2x32xf32>
    %105 = arith.mulf %100, %104 : vector<2x32xf32>
    %c10 = arith.constant 10 : index
    %c0_30 = arith.constant 0 : index
    %106 = vector.load %arg4[%c10, %c0_30] : memref<16x128xf32, #tpu.memory_space<vmem>>, vector<2x128xf32>
    %cst_31 = arith.constant dense<0.000000e+00> : vector<2x128xf32>
    %107 = tpu.matmul %105, %7, %cst_31 {dimension_numbers = #tpu.dot_dimension_numbers<[1], [0], [0], [1], [0, 0, 1, 1], [], []>} : vector<2x32xf32>, vector<32x128xf32>, vector<2x128xf32> -> vector<2x128xf32>
    %108 = arith.addf %106, %107 : vector<2x128xf32>
    %109 = math.tanh %108 : vector<2x128xf32>
    %cst_32 = arith.constant 5.000000e-01 : f32
    %110 = vector.broadcast %cst_32 : f32 to vector<2x128xf32>
    %111 = arith.mulf %110, %109 : vector<2x128xf32>
    %cst_33 = arith.constant 5.000000e-01 : f32
    %112 = vector.broadcast %cst_33 : f32 to vector<2x128xf32>
    %113 = arith.addf %111, %112 : vector<2x128xf32>
    %114 = arith.select %13, %109, %113 : vector<2x128xi1>, vector<2x128xf32>
    %115 = vector.extract_strided_slice %114 {offsets = [0, 0], sizes = [2, 32], strides = [1, 1]} : vector<2x128xf32> to vector<2x32xf32>
    %116 = vector.extract_strided_slice %114 {offsets = [0, 32], sizes = [2, 32], strides = [1, 1]} : vector<2x128xf32> to vector<2x32xf32>
    %117 = vector.extract_strided_slice %114 {offsets = [0, 64], sizes = [2, 32], strides = [1, 1]} : vector<2x128xf32> to vector<2x32xf32>
    %118 = vector.extract_strided_slice %114 {offsets = [0, 96], sizes = [2, 32], strides = [1, 1]} : vector<2x128xf32> to vector<2x32xf32>
    %119 = arith.mulf %116, %103 : vector<2x32xf32>
    %120 = arith.mulf %115, %117 : vector<2x32xf32>
    %121 = arith.addf %119, %120 : vector<2x32xf32>
    %122 = math.tanh %121 : vector<2x32xf32>
    %123 = arith.mulf %118, %122 : vector<2x32xf32>
    %c12 = arith.constant 12 : index
    %c0_34 = arith.constant 0 : index
    %124 = vector.load %arg4[%c12, %c0_34] : memref<16x128xf32, #tpu.memory_space<vmem>>, vector<2x128xf32>
    %cst_35 = arith.constant dense<0.000000e+00> : vector<2x128xf32>
    %125 = tpu.matmul %123, %7, %cst_35 {dimension_numbers = #tpu.dot_dimension_numbers<[1], [0], [0], [1], [0, 0, 1, 1], [], []>} : vector<2x32xf32>, vector<32x128xf32>, vector<2x128xf32> -> vector<2x128xf32>
    %126 = arith.addf %124, %125 : vector<2x128xf32>
    %127 = math.tanh %126 : vector<2x128xf32>
    %cst_36 = arith.constant 5.000000e-01 : f32
    %128 = vector.broadcast %cst_36 : f32 to vector<2x128xf32>
    %129 = arith.mulf %128, %127 : vector<2x128xf32>
    %cst_37 = arith.constant 5.000000e-01 : f32
    %130 = vector.broadcast %cst_37 : f32 to vector<2x128xf32>
    %131 = arith.addf %129, %130 : vector<2x128xf32>
    %132 = arith.select %13, %127, %131 : vector<2x128xi1>, vector<2x128xf32>
    %133 = vector.extract_strided_slice %132 {offsets = [0, 0], sizes = [2, 32], strides = [1, 1]} : vector<2x128xf32> to vector<2x32xf32>
    %134 = vector.extract_strided_slice %132 {offsets = [0, 32], sizes = [2, 32], strides = [1, 1]} : vector<2x128xf32> to vector<2x32xf32>
    %135 = vector.extract_strided_slice %132 {offsets = [0, 64], sizes = [2, 32], strides = [1, 1]} : vector<2x128xf32> to vector<2x32xf32>
    %136 = vector.extract_strided_slice %132 {offsets = [0, 96], sizes = [2, 32], strides = [1, 1]} : vector<2x128xf32> to vector<2x32xf32>
    %137 = arith.mulf %134, %121 : vector<2x32xf32>
    %138 = arith.mulf %133, %135 : vector<2x32xf32>
    %139 = arith.addf %137, %138 : vector<2x32xf32>
    %140 = math.tanh %139 : vector<2x32xf32>
    %141 = arith.mulf %136, %140 : vector<2x32xf32>
    %c14 = arith.constant 14 : index
    %c0_38 = arith.constant 0 : index
    %142 = vector.load %arg4[%c14, %c0_38] : memref<16x128xf32, #tpu.memory_space<vmem>>, vector<2x128xf32>
    %cst_39 = arith.constant dense<0.000000e+00> : vector<2x128xf32>
    %143 = tpu.matmul %141, %7, %cst_39 {dimension_numbers = #tpu.dot_dimension_numbers<[1], [0], [0], [1], [0, 0, 1, 1], [], []>} : vector<2x32xf32>, vector<32x128xf32>, vector<2x128xf32> -> vector<2x128xf32>
    %144 = arith.addf %142, %143 : vector<2x128xf32>
    %145 = math.tanh %144 : vector<2x128xf32>
    %cst_40 = arith.constant 5.000000e-01 : f32
    %146 = vector.broadcast %cst_40 : f32 to vector<2x128xf32>
    %147 = arith.mulf %146, %145 : vector<2x128xf32>
    %cst_41 = arith.constant 5.000000e-01 : f32
    %148 = vector.broadcast %cst_41 : f32 to vector<2x128xf32>
    %149 = arith.addf %147, %148 : vector<2x128xf32>
    %150 = arith.select %13, %145, %149 : vector<2x128xi1>, vector<2x128xf32>
    %151 = vector.extract_strided_slice %150 {offsets = [0, 0], sizes = [2, 32], strides = [1, 1]} : vector<2x128xf32> to vector<2x32xf32>
    %152 = vector.extract_strided_slice %150 {offsets = [0, 32], sizes = [2, 32], strides = [1, 1]} : vector<2x128xf32> to vector<2x32xf32>
    %153 = vector.extract_strided_slice %150 {offsets = [0, 64], sizes = [2, 32], strides = [1, 1]} : vector<2x128xf32> to vector<2x32xf32>
    %154 = vector.extract_strided_slice %150 {offsets = [0, 96], sizes = [2, 32], strides = [1, 1]} : vector<2x128xf32> to vector<2x32xf32>
    %155 = arith.mulf %152, %139 : vector<2x32xf32>
    %156 = arith.mulf %151, %153 : vector<2x32xf32>
    %157 = arith.addf %155, %156 : vector<2x32xf32>
    %158 = math.tanh %157 : vector<2x32xf32>
    %159 = arith.mulf %154, %158 : vector<2x32xf32>
    %c0_42 = arith.constant 0 : index
    %c0_43 = arith.constant 0 : index
    %160 = vector.load %arg2[%c0_42, %c0_43] : memref<33x128xf32, #tpu.memory_space<vmem>>, vector<32x128xf32>
    %cst_44 = arith.constant dense<0.000000e+00> : vector<2x128xf32>
    %161 = tpu.matmul %159, %160, %cst_44 {dimension_numbers = #tpu.dot_dimension_numbers<[1], [0], [0], [1], [0, 0, 1, 1], [], []>} : vector<2x32xf32>, vector<32x128xf32>, vector<2x128xf32> -> vector<2x128xf32>
    %c32 = arith.constant 32 : index
    %c0_45 = arith.constant 0 : index
    %162 = vector.load %arg2[%c32, %c0_45] : memref<33x128xf32, #tpu.memory_space<vmem>>, vector<1x128xf32>
    %163 = vector.broadcast %162 : vector<1x128xf32> to vector<2x128xf32>
    %164 = arith.addf %161, %163 : vector<2x128xf32>
    %c0_46 = arith.constant 0 : index
    %c0_47 = arith.constant 0 : index
    %165 = vector.load %arg3[%c0_46, %c0_47] : memref<2x128xf32, #tpu.memory_space<vmem>>, vector<2x128xf32>
    tpu.vector_store %arg3[%c0_46, %c0_47], %164 {strides = array<i32>} : memref<2x128xf32, #tpu.memory_space<vmem>>, vector<2x128xf32>,
    return
  }
}

</mosaic_0001>

<llo_original>
// kernel: tpu_custom_call.1
$region0: #{tpu_custom_call.1}
  #allocation0 [shape = 'u32[]', space=smem, size = 0x4, offset = 0x4, fixed_abs, tag = 'smem constant byte address 0x4 - core index']
  #allocation1 [shape = 'u32[72,128]{1,0:T(1,128)}', space=vmem, size = 0x9000, scoped, tag = 'internal scratch']
  #allocation2 [shape = 'f32[16,128]{1,0:T(8,128)}', space=vmem, size = 0x2000, scoped, tag = 'scratch operand']
  %s0 = inlined_call_operand.hbm [shape: f32[16,16], index: 0, kind: input, shape index: {}]
  %s1 = inlined_call_operand.hbm [shape: f32[49,128], index: 1, kind: input, shape index: {}]
  %s2 = inlined_call_operand.hbm [shape: f32[33,128], index: 2, kind: input, shape index: {}]
  %s3 = inlined_call_operand.hbm [shape: f32[2,128], index: 3, kind: output, shape index: {}]
  %s4 = sld [smem:[#allocation0]]
  $region34: #{tpu_custom_call.1} parent=0
    _
  %s6 = ssub.s32 1, %s4
  %s7 = scalar_select 0, %s6, %s4
  $region1: #{tpu_custom_call.1} parent=0
    #allocation3 [shape = 'u8[8192]{0}', space=vmem, size = 0x2000, scoped, tag = 'input window, operand 0, single buffered']
    #allocation4 [shape = 's32[1]{0}', space=sflag, size = 0x4, scoped, tag = 'scoped memory for tpu_custom_call.1']
    #allocation5 [shape = 's32[1]{0}', space=sflag, size = 0x4, scoped, tag = 'scoped memory for tpu_custom_call.1']
    #allocation6 [shape = 'u8[28672]{0}', space=vmem, size = 0x7000, scoped, tag = 'input window, operand 1, single buffered']
    #allocation7 [shape = 's32[1]{0}', space=sflag, size = 0x4, scoped, tag = 'scoped memory for tpu_custom_call.1']
    #allocation8 [shape = 'u8[20480]{0}', space=vmem, size = 0x5000, scoped, tag = 'input window, operand 2, single buffered']
    #allocation9 [shape = 'u8[1024]{0}', space=vmem, size = 0x400, scoped, tag = 'output window, operand 0, single buffered']
    %8 = vsyncpa [#allocation4], 0
    %9 = vsyncpa [#allocation7], 0
    %10 = vsyncpa [#allocation5], 0
    // Predicated region
    $region2: #{tpu_custom_call.1} parent=1 // pred_check
      _
    $region3: #{tpu_custom_call.1} parent=1 // pred_check_branch
      %12 = sbr.rel (0) target = $region5
    $region4: #{tpu_custom_call.1} parent=1 // pred_region
      %14 = vsyncadd [#allocation4], 0
      %s15 = sshll.u32 %s0, 4
      %s16 = int_to_ptr.hbm [resolvable:$true] %s15
      %s17 = sshll.u32 [#allocation3], 4
      %s18 = int_to_ptr.vmem [resolvable:$true] %s17
      %23 = dma.hbm_to_vmem [thread:$0]  %s16, 256, %s18, [#allocation4], 128, 128, 8
    $region5: #{tpu_custom_call.1} parent=1 // pred_fallthru
      _
    // Predicated region
    $region6: #{tpu_custom_call.1} parent=1 // pred_check
      _
    $region7: #{tpu_custom_call.1} parent=1 // pred_check_branch
      %25 = sbr.rel (0) target = $region9
    $region8: #{tpu_custom_call.1} parent=1 // pred_region
      %27 = vsyncadd [#allocation7], 0
      %s28 = sshll.u32 %s1, 4
      %s29 = int_to_ptr.hbm [resolvable:$true] %s28
      %s30 = sshll.u32 [#allocation6], 4
      %s31 = int_to_ptr.vmem [resolvable:$true] %s30
      %36 = dma.hbm_to_vmem [thread:$0]  %s29, 896, %s31, [#allocation7], 128, 128, 8
    $region9: #{tpu_custom_call.1} parent=1 // pred_fallthru
      _
    // Predicated region
    $region10: #{tpu_custom_call.1} parent=1 // pred_check
      _
    $region11: #{tpu_custom_call.1} parent=1 // pred_check_branch
      %38 = sbr.rel (0) target = $region13
    $region12: #{tpu_custom_call.1} parent=1 // pred_region
      %40 = vsyncadd [#allocation7], 0
      %s41 = sshll.u32 %s2, 4
      %s42 = int_to_ptr.hbm [resolvable:$true] %s41
      %s43 = sshll.u32 [#allocation8], 4
      %s44 = int_to_ptr.vmem [resolvable:$true] %s43
      %49 = dma.hbm_to_vmem [thread:$0]  %s42, 640, %s44, [#allocation7], 128, 128, 8
    $region13: #{tpu_custom_call.1} parent=1 // pred_fallthru
      _
    // Predicated region
    $region14: #{tpu_custom_call.1} parent=1 // pred_check
      _
    $region15: #{tpu_custom_call.1} parent=1 // pred_check_branch
      %51 = sbr.rel (0) target = $region17
    $region16: #{tpu_custom_call.1} parent=1 // pred_region
      %53 = dma.done [#allocation4], 256
    $region17: #{tpu_custom_call.1} parent=1 // pred_fallthru
      _
    // Predicated region
    $region18: #{tpu_custom_call.1} parent=1 // pred_check
      _
    $region19: #{tpu_custom_call.1} parent=1 // pred_check_branch
      %55 = sbr.rel (0) target = $region21
    $region20: #{tpu_custom_call.1} parent=1 // pred_region
      %57 = dma.done [#allocation7], 896
    $region21: #{tpu_custom_call.1} parent=1 // pred_fallthru
      _
    // Predicated region
    $region22: #{tpu_custom_call.1} parent=1 // pred_check
      _
    $region23: #{tpu_custom_call.1} parent=1 // pred_check_branch
      %59 = sbr.rel (0) target = $region25
    $region24: #{tpu_custom_call.1} parent=1 // pred_region
      %61 = dma.done [#allocation7], 640
    $region25: #{tpu_custom_call.1} parent=1 // pred_fallthru
      _
    %v62 = vld [vmem:[#allocation3] sm:$0xff]
    %v63 = vld [vmem:[#allocation3 + $0x8] sm:$0xff]
    %v64 = vld [vmem:[#allocation6] sm:$0xff]
    %v65 = vld [vmem:[#allocation6 + $0x8] sm:$0xff]
    %v66 = vld [vmem:[#allocation6 + $0x30] sm:$0x1]
    %v67 = vperm.slane %v66, 0
    %vm68 = vcmask 130048
    %v70 = vsel %vm68, %v62, 0
    %v73 = vsel %vm68, %v63, 0
    %75 = vmatpush.msra.mxu0 0.0
    %76 = vmatpush.msra.mxu0 0.0
    %77 = vmatpush.msra.mxu0 0.0
    %78 = vmatpush.msra.mxu0 0.0
    %79 = vmatpush.msra.mxu0 0.0
    %80 = vmatpush.msra.mxu0 0.0
    %81 = vmatpush.msra.mxu0 0.0
    %82 = vmatpush.msra.mxu0 0.0
    %83 = vmatpush.msra.mxu0 0.0
    %84 = vmatpush.msra.mxu0 0.0
    %85 = vmatpush.msra.mxu0 0.0
    %86 = vmatpush.msra.mxu0 0.0
    %87 = vmatpush.msra.mxu0 0.0
    %88 = vmatpush.msra.mxu0 0.0
    %89 = vmatpush.msra.mxu0 %v65
    %90 = vmatpush.msra.mxu0 %v64
    %91 = vmatmul.f32.gmra.mxu0 %v70
    %v92 = vpop.f32.mrf.mxu0
    %v93 = vadd.f32 %v67, %v92
    %94 = vmatmul.f32.gmra.mxu0 %v73
    %v95 = vpop.f32.mrf.mxu0
    %v96 = vadd.f32 %v67, %v95
    %97 = vdwg.mxu0
    %98 = vst [vmem:[#allocation2] sm:$0xff] %v93
    %99 = vst [vmem:[#allocation2 + $0x8] sm:$0xff] %v96
    %v100 = vld [vmem:[#allocation6 + $0x10] sm:$0xff]
    %v101 = vld [vmem:[#allocation6 + $0x18] sm:$0xff]
    %v102 = vld [vmem:[#allocation6 + $0x20] sm:$0xff]
    %v103 = vld [vmem:[#allocation6 + $0x28] sm:$0xff]
    %v104 = vlaneseq
    %v105 = vand.u32 %v104, 127
    %vm106 = vcmp.ge.s32.totalorder %v105, 64
    %vm107 = vcmp.lt.s32.totalorder %v105, 96
    %vm108 = vmand %vm106, %vm107
    %v109 = vld [vmem:[#allocation2] sm:$0x3]
    %vm110 = vcmask 261120
    %v112 = vsel %vm110, 0.0, 0
    %114 = vmatpush.msra.mxu0 0.0
    %115 = vmatpush.msra.mxu0 0.0
    %116 = vmatpush.msra.mxu0 0.0
    %117 = vmatpush.msra.mxu0 0.0
    %118 = vmatpush.msra.mxu0 0.0
    %119 = vmatpush.msra.mxu0 0.0
    %120 = vmatpush.msra.mxu0 0.0
    %121 = vmatpush.msra.mxu0 0.0
    %122 = vmatpush.msra.mxu0 0.0
    %123 = vmatpush.msra.mxu0 0.0
    %124 = vmatpush.msra.mxu0 0.0
    %125 = vmatpush.msra.mxu0 0.0
    %126 = vmatpush.msra.mxu0 %v103
    %127 = vmatpush.msra.mxu0 %v102
    %128 = vmatpush.msra.mxu0 %v101
    %129 = vmatpush.msra.mxu0 %v100
    %130 = vmatmul.f32.gmra.mxu0 %v112
    %v131 = vpop.f32.mrf.mxu0
    %v132 = vadd.f32 0.0, %v131
    %133 = vdwg.mxu0
    %v134 = vadd.f32 %v109, %v132
    %v135 = vtanh.pop %v134
    %v136 = vmul.f32 %v135, 0.5
    %v137 = vadd.f32 %v136, 0.5
    %v138 = vsel %vm108, %v135, %v137
    %v139 = vmul.f32 %v138, 0.0
    %141 = vrot.lane.b32.xlu0 %v138, 64
    %v142 = vpop.permute.xlu0 %141
    %v144 = vmul.f32 %v138, %v142
    %146 = vrot.lane.b32.xlu0 %v144, 32
    %v147 = vpop.permute.xlu0 %146
    %v149 = vadd.f32 %v139, %v147
    %v150 = vtanh.pop %v149
    %152 = vrot.lane.b32.xlu0 %v150, 64
    %v153 = vpop.permute.xlu0 %152
    %v155 = vmul.f32 %v138, %v153
    %v156 = vld [vmem:[#allocation2 + $0x2] sm:$0x3]
    %158 = vrot.lane.b32.xlu0 %v155, 32
    %v159 = vpop.permute.xlu0 %158
    %v160 = vsel %vm110, %v159, 0
    %162 = vmatpush.msra.mxu0 0.0
    %163 = vmatpush.msra.mxu0 0.0
    %164 = vmatpush.msra.mxu0 0.0
    %165 = vmatpush.msra.mxu0 0.0
    %166 = vmatpush.msra.mxu0 0.0
    %167 = vmatpush.msra.mxu0 0.0
    %168 = vmatpush.msra.mxu0 0.0
    %169 = vmatpush.msra.mxu0 0.0
    %170 = vmatpush.msra.mxu0 0.0
    %171 = vmatpush.msra.mxu0 0.0
    %172 = vmatpush.msra.mxu0 0.0
    %173 = vmatpush.msra.mxu0 0.0
    %174 = vmatpush.msra.mxu0 %v103
    %175 = vmatpush.msra.mxu0 %v102
    %176 = vmatpush.msra.mxu0 %v101
    %177 = vmatpush.msra.mxu0 %v100
    %178 = vmatmul.f32.gmra.mxu0 %v160
    %v179 = vpop.f32.mrf.mxu0
    %v180 = vadd.f32 0.0, %v179
    %181 = vdwg.mxu0
    %v182 = vadd.f32 %v156, %v180
    %v183 = vtanh.pop %v182
    %v184 = vmul.f32 %v183, 0.5
    %v185 = vadd.f32 %v184, 0.5
    %v186 = vsel %vm108, %v183, %v185
    %v187 = vmul.f32 %v186, %v149
    %189 = vrot.lane.b32.xlu0 %v186, 64
    %v190 = vpop.permute.xlu0 %189
    %v192 = vmul.f32 %v186, %v190
    %194 = vrot.lane.b32.xlu0 %v192, 32
    %v195 = vpop.permute.xlu0 %194
    %v197 = vadd.f32 %v187, %v195
    %v198 = vtanh.pop %v197
    %200 = vrot.lane.b32.xlu0 %v198, 64
    %v201 = vpop.permute.xlu0 %200
    %v203 = vmul.f32 %v186, %v201
    %v204 = vld [vmem:[#allocation2 + $0x4] sm:$0x3]
    %206 = vrot.lane.b32.xlu0 %v203, 32
    %v207 = vpop.permute.xlu0 %206
    %v208 = vsel %vm110, %v207, 0
    %210 = vmatpush.msra.mxu0 0.0
    %211 = vmatpush.msra.mxu0 0.0
    %212 = vmatpush.msra.mxu0 0.0
    %213 = vmatpush.msra.mxu0 0.0
    %214 = vmatpush.msra.mxu0 0.0
    %215 = vmatpush.msra.mxu0 0.0
    %216 = vmatpush.msra.mxu0 0.0
    %217 = vmatpush.msra.mxu0 0.0
    %218 = vmatpush.msra.mxu0 0.0
    %219 = vmatpush.msra.mxu0 0.0
    %220 = vmatpush.msra.mxu0 0.0
    %221 = vmatpush.msra.mxu0 0.0
    %222 = vmatpush.msra.mxu0 %v103
    %223 = vmatpush.msra.mxu0 %v102
    %224 = vmatpush.msra.mxu0 %v101
    %225 = vmatpush.msra.mxu0 %v100
    %226 = vmatmul.f32.gmra.mxu0 %v208
    %v227 = vpop.f32.mrf.mxu0
    %v228 = vadd.f32 0.0, %v227
    %229 = vdwg.mxu0
    %v230 = vadd.f32 %v204, %v228
    %v231 = vtanh.pop %v230
    %v232 = vmul.f32 %v231, 0.5
    %v233 = vadd.f32 %v232, 0.5
    %v234 = vsel %vm108, %v231, %v233
    %v235 = vmul.f32 %v234, %v197
    %237 = vrot.lane.b32.xlu0 %v234, 64
    %v238 = vpop.permute.xlu0 %237
    %v240 = vmul.f32 %v234, %v238
    %242 = vrot.lane.b32.xlu0 %v240, 32
    %v243 = vpop.permute.xlu0 %242
    %v245 = vadd.f32 %v235, %v243
    %v246 = vtanh.pop %v245
    %248 = vrot.lane.b32.xlu0 %v246, 64
    %v249 = vpop.permute.xlu0 %248
    %v251 = vmul.f32 %v234, %v249
    %v252 = vld [vmem:[#allocation2 + $0x6] sm:$0x3]
    %254 = vrot.lane.b32.xlu0 %v251, 32
    %v255 = vpop.permute.xlu0 %254
    %v256 = vsel %vm110, %v255, 0
    %258 = vmatpush.msra.mxu0 0.0
    %259 = vmatpush.msra.mxu0 0.0
    %260 = vmatpush.msra.mxu0 0.0
    %261 = vmatpush.msra.mxu0 0.0
    %262 = vmatpush.msra.mxu0 0.0
    %263 = vmatpush.msra.mxu0 0.0
    %264 = vmatpush.msra.mxu0 0.0
    %265 = vmatpush.msra.mxu0 0.0
    %266 = vmatpush.msra.mxu0 0.0
    %267 = vmatpush.msra.mxu0 0.0
    %268 = vmatpush.msra.mxu0 0.0
    %269 = vmatpush.msra.mxu0 0.0
    %270 = vmatpush.msra.mxu0 %v103
    %271 = vmatpush.msra.mxu0 %v102
    %272 = vmatpush.msra.mxu0 %v101
    %273 = vmatpush.msra.mxu0 %v100
    %274 = vmatmul.f32.gmra.mxu0 %v256
    %v275 = vpop.f32.mrf.mxu0
    %v276 = vadd.f32 0.0, %v275
    %277 = vdwg.mxu0
    %v278 = vadd.f32 %v252, %v276
    %v279 = vtanh.pop %v278
    %v280 = vmul.f32 %v279, 0.5
    %v281 = vadd.f32 %v280, 0.5
    %v282 = vsel %vm108, %v279, %v281
    %v283 = vmul.f32 %v282, %v245
    %285 = vrot.lane.b32.xlu0 %v282, 64
    %v286 = vpop.permute.xlu0 %285
    %v288 = vmul.f32 %v282, %v286
    %290 = vrot.lane.b32.xlu0 %v288, 32
    %v291 = vpop.permute.xlu0 %290
    %v293 = vadd.f32 %v283, %v291
    %v294 = vtanh.pop %v293
    %296 = vrot.lane.b32.xlu0 %v294, 64
    %v297 = vpop.permute.xlu0 %296
    %v299 = vmul.f32 %v282, %v297
    %v300 = vld [vmem:[#allocation2 + $0x8] sm:$0x3]
    %302 = vrot.lane.b32.xlu0 %v299, 32
    %v303 = vpop.permute.xlu0 %302
    %v304 = vsel %vm110, %v303, 0
    %306 = vmatpush.msra.mxu0 0.0
    %307 = vmatpush.msra.mxu0 0.0
    %308 = vmatpush.msra.mxu0 0.0
    %309 = vmatpush.msra.mxu0 0.0
    %310 = vmatpush.msra.mxu0 0.0
    %311 = vmatpush.msra.mxu0 0.0
    %312 = vmatpush.msra.mxu0 0.0
    %313 = vmatpush.msra.mxu0 0.0
    %314 = vmatpush.msra.mxu0 0.0
    %315 = vmatpush.msra.mxu0 0.0
    %316 = vmatpush.msra.mxu0 0.0
    %317 = vmatpush.msra.mxu0 0.0
    %318 = vmatpush.msra.mxu0 %v103
    %319 = vmatpush.msra.mxu0 %v102
    %320 = vmatpush.msra.mxu0 %v101
    %321 = vmatpush.msra.mxu0 %v100
    %322 = vmatmul.f32.gmra.mxu0 %v304
    %v323 = vpop.f32.mrf.mxu0
    %v324 = vadd.f32 0.0, %v323
    %325 = vdwg.mxu0
    %v326 = vadd.f32 %v300, %v324
    %v327 = vtanh.pop %v326
    %v328 = vmul.f32 %v327, 0.5
    %v329 = vadd.f32 %v328, 0.5
    %v330 = vsel %vm108, %v327, %v329
    %v331 = vmul.f32 %v330, %v293
    %333 = vrot.lane.b32.xlu0 %v330, 64
    %v334 = vpop.permute.xlu0 %333
    %v336 = vmul.f32 %v330, %v334
    %338 = vrot.lane.b32.xlu0 %v336, 32
    %v339 = vpop.permute.xlu0 %338
    %v341 = vadd.f32 %v331, %v339
    %v342 = vtanh.pop %v341
    %344 = vrot.lane.b32.xlu0 %v342, 64
    %v345 = vpop.permute.xlu0 %344
    %v347 = vmul.f32 %v330, %v345
    %v348 = vld [vmem:[#allocation2 + $0xa] sm:$0x3]
    %350 = vrot.lane.b32.xlu0 %v347, 32
    %v351 = vpop.permute.xlu0 %350
    %v352 = vsel %vm110, %v351, 0
    %354 = vmatpush.msra.mxu0 0.0
    %355 = vmatpush.msra.mxu0 0.0
    %356 = vmatpush.msra.mxu0 0.0
    %357 = vmatpush.msra.mxu0 0.0
    %358 = vmatpush.msra.mxu0 0.0
    %359 = vmatpush.msra.mxu0 0.0
    %360 = vmatpush.msra.mxu0 0.0
    %361 = vmatpush.msra.mxu0 0.0
    %362 = vmatpush.msra.mxu0 0.0
    %363 = vmatpush.msra.mxu0 0.0
    %364 = vmatpush.msra.mxu0 0.0
    %365 = vmatpush.msra.mxu0 0.0
    %366 = vmatpush.msra.mxu0 %v103
    %367 = vmatpush.msra.mxu0 %v102
    %368 = vmatpush.msra.mxu0 %v101
    %369 = vmatpush.msra.mxu0 %v100
    %370 = vmatmul.f32.gmra.mxu0 %v352
    %v371 = vpop.f32.mrf.mxu0
    %v372 = vadd.f32 0.0, %v371
    %373 = vdwg.mxu0
    %v374 = vadd.f32 %v348, %v372
    %v375 = vtanh.pop %v374
    %v376 = vmul.f32 %v375, 0.5
    %v377 = vadd.f32 %v376, 0.5
    %v378 = vsel %vm108, %v375, %v377
    %v379 = vmul.f32 %v378, %v341
    %381 = vrot.lane.b32.xlu0 %v378, 64
    %v382 = vpop.permute.xlu0 %381
    %v384 = vmul.f32 %v378, %v382
    %386 = vrot.lane.b32.xlu0 %v384, 32
    %v387 = vpop.permute.xlu0 %386
    %v389 = vadd.f32 %v379, %v387
    %v390 = vtanh.pop %v389
    %392 = vrot.lane.b32.xlu0 %v390, 64
    %v393 = vpop.permute.xlu0 %392
    %v395 = vmul.f32 %v378, %v393
    %v396 = vld [vmem:[#allocation2 + $0xc] sm:$0x3]
    %398 = vrot.lane.b32.xlu0 %v395, 32
    %v399 = vpop.permute.xlu0 %398
    %v400 = vsel %vm110, %v399, 0
    %402 = vmatpush.msra.mxu0 0.0
    %403 = vmatpush.msra.mxu0 0.0
    %404 = vmatpush.msra.mxu0 0.0
    %405 = vmatpush.msra.mxu0 0.0
    %406 = vmatpush.msra.mxu0 0.0
    %407 = vmatpush.msra.mxu0 0.0
    %408 = vmatpush.msra.mxu0 0.0
    %409 = vmatpush.msra.mxu0 0.0
    %410 = vmatpush.msra.mxu0 0.0
    %411 = vmatpush.msra.mxu0 0.0
    %412 = vmatpush.msra.mxu0 0.0
    %413 = vmatpush.msra.mxu0 0.0
    %414 = vmatpush.msra.mxu0 %v103
    %415 = vmatpush.msra.mxu0 %v102
    %416 = vmatpush.msra.mxu0 %v101
    %417 = vmatpush.msra.mxu0 %v100
    %418 = vmatmul.f32.gmra.mxu0 %v400
    %v419 = vpop.f32.mrf.mxu0
    %v420 = vadd.f32 0.0, %v419
    %421 = vdwg.mxu0
    %v422 = vadd.f32 %v396, %v420
    %v423 = vtanh.pop %v422
    %v424 = vmul.f32 %v423, 0.5
    %v425 = vadd.f32 %v424, 0.5
    %v426 = vsel %vm108, %v423, %v425
    %v427 = vmul.f32 %v426, %v389
    %429 = vrot.lane.b32.xlu0 %v426, 64
    %v430 = vpop.permute.xlu0 %429
    %v432 = vmul.f32 %v426, %v430
    %434 = vrot.lane.b32.xlu0 %v432, 32
    %v435 = vpop.permute.xlu0 %434
    %v437 = vadd.f32 %v427, %v435
    %v438 = vtanh.pop %v437
    %440 = vrot.lane.b32.xlu0 %v438, 64
    %v441 = vpop.permute.xlu0 %440
    %v443 = vmul.f32 %v426, %v441
    %v444 = vld [vmem:[#allocation2 + $0xe] sm:$0x3]
    %446 = vrot.lane.b32.xlu0 %v443, 32
    %v447 = vpop.permute.xlu0 %446
    %v448 = vsel %vm110, %v447, 0
    %450 = vmatpush.msra.mxu0 0.0
    %451 = vmatpush.msra.mxu0 0.0
    %452 = vmatpush.msra.mxu0 0.0
    %453 = vmatpush.msra.mxu0 0.0
    %454 = vmatpush.msra.mxu0 0.0
    %455 = vmatpush.msra.mxu0 0.0
    %456 = vmatpush.msra.mxu0 0.0
    %457 = vmatpush.msra.mxu0 0.0
    %458 = vmatpush.msra.mxu0 0.0
    %459 = vmatpush.msra.mxu0 0.0
    %460 = vmatpush.msra.mxu0 0.0
    %461 = vmatpush.msra.mxu0 0.0
    %462 = vmatpush.msra.mxu0 %v103
    %463 = vmatpush.msra.mxu0 %v102
    %464 = vmatpush.msra.mxu0 %v101
    %465 = vmatpush.msra.mxu0 %v100
    %466 = vmatmul.f32.gmra.mxu0 %v448
    %v467 = vpop.f32.mrf.mxu0
    %v468 = vadd.f32 0.0, %v467
    %469 = vdwg.mxu0
    %v470 = vadd.f32 %v444, %v468
    %v471 = vtanh.pop %v470
    %v472 = vmul.f32 %v471, 0.5
    %v473 = vadd.f32 %v472, 0.5
    %v474 = vsel %vm108, %v471, %v473
    %v475 = vmul.f32 %v474, %v437
    %477 = vrot.lane.b32.xlu0 %v474, 64
    %v478 = vpop.permute.xlu0 %477
    %v480 = vmul.f32 %v474, %v478
    %482 = vrot.lane.b32.xlu0 %v480, 32
    %v483 = vpop.permute.xlu0 %482
    %v485 = vadd.f32 %v475, %v483
    %v486 = vtanh.pop %v485
    %488 = vrot.lane.b32.xlu0 %v486, 64
    %v489 = vpop.permute.xlu0 %488
    %v491 = vmul.f32 %v474, %v489
    %v492 = vld [vmem:[#allocation8] sm:$0xff]
    %v493 = vld [vmem:[#allocation8 + $0x8] sm:$0xff]
    %v494 = vld [vmem:[#allocation8 + $0x10] sm:$0xff]
    %v495 = vld [vmem:[#allocation8 + $0x18] sm:$0xff]
    %v496 = vld [vmem:[#allocation8 + $0x20] sm:$0x1]
    %v497 = vperm.slane %v496, 0
    %499 = vrot.lane.b32.xlu0 %v491, 32
    %v500 = vpop.permute.xlu0 %499
    %v501 = vsel %vm110, %v500, 0
    %503 = vmatpush.msra.mxu0 0.0
    %504 = vmatpush.msra.mxu0 0.0
    %505 = vmatpush.msra.mxu0 0.0
    %506 = vmatpush.msra.mxu0 0.0
    %507 = vmatpush.msra.mxu0 0.0
    %508 = vmatpush.msra.mxu0 0.0
    %509 = vmatpush.msra.mxu0 0.0
    %510 = vmatpush.msra.mxu0 0.0
    %511 = vmatpush.msra.mxu0 0.0
    %512 = vmatpush.msra.mxu0 0.0
    %513 = vmatpush.msra.mxu0 0.0
    %514 = vmatpush.msra.mxu0 0.0
    %515 = vmatpush.msra.mxu0 %v495
    %516 = vmatpush.msra.mxu0 %v494
    %517 = vmatpush.msra.mxu0 %v493
    %518 = vmatpush.msra.mxu0 %v492
    %519 = vmatmul.f32.gmra.mxu0 %v501
    %v520 = vpop.f32.mrf.mxu0
    %v521 = vadd.f32 %v497, %v520
    %522 = vdwg.mxu0
    %523 = vst [vmem:[#allocation9] sm:$0x3] %v521
    // Predicated region
    $region26: #{tpu_custom_call.1} parent=1 // pred_check
      _
    $region27: #{tpu_custom_call.1} parent=1 // pred_check_branch
      %525 = sbr.rel (0) target = $region29
    $region28: #{tpu_custom_call.1} parent=1 // pred_region
      %527 = vsyncadd [#allocation5], 0
      %s529 = sshll.u32 [#allocation9], 4
      %s530 = int_to_ptr.vmem [resolvable:$true] %s529
      %s531 = sshll.u32 %s3, 4
      %s532 = int_to_ptr.hbm [resolvable:$true] %s531
      %534 = dma.vmem_to_hbm [thread:$0]  %s530, 32, %s532, [#allocation5]
    $region29: #{tpu_custom_call.1} parent=1 // pred_fallthru
      _
    // Predicated region
    $region30: #{tpu_custom_call.1} parent=1 // pred_check
      _
    $region31: #{tpu_custom_call.1} parent=1 // pred_check_branch
      %536 = sbr.rel (0) target = $region33
    $region32: #{tpu_custom_call.1} parent=1 // pred_region
      %538 = dma.done [#allocation5], 32
    $region33: #{tpu_custom_call.1} parent=1 // pred_fallthru
      _
    %539 = vsyncpa [#allocation4], 1
    %540 = vsyncpa [#allocation7], 1
    %541 = vsyncpa [#allocation5], 1

</llo_original>
